<compile_context>
chip_gen: v7x
topology: tpu7x:2x2x1
jax: 0.10.0
libtpu: 0.0.40
codegen_flags: <defaults>
</compile_context>

<pallas_src>
import functools
import math

import jax
import jax.numpy as jnp
import numpy as np
from jax import lax
from jax.experimental import pallas as pl
from jax.experimental.pallas import tpu as pltpu


def _adaptive_pool_matrix(H, W, levels):
    """(P, H*W) matrix whose row p averages spatial bin p.

    Bin boundaries match torch.nn.functional.adaptive_avg_pool2d:
      start = floor(i*H/n), end = ceil((i+1)*H/n).
    Stored transposed (P on sublanes, H*W on lanes) for a small VMEM footprint.
    """
    rows = []
    for n in levels:
        for i in range(n):
            h0 = (i * H) // n
            h1 = -(-((i + 1) * H) // n)
            for j in range(n):
                w0 = (j * W) // n
                w1 = -(-((j + 1) * W) // n)
                m = np.zeros((H, W), dtype=np.float32)
                m[h0:h1, w0:w1] = 1.0 / float((h1 - h0) * (w1 - w0))
                rows.append(m.reshape(-1))
    return np.stack(rows, axis=0)  # (P, H*W)


def _pool_ca_kernel(d_ref, u_ref, pm_ref, o_ref, *, inv_sqrt_dk):
    # d_ref : (1, C,  HWp)  full key/value channel slab (resident across query tiles)
    # u_ref : (1, TQ, HWp)  query-channel tile
    # pm_ref: (P,  HWp)     pooling matrix (transposed)
    # o_ref : (1, TQ, HWp)
    d = d_ref[0]            # (C, HWp)  native dtype
    u = u_ref[0]            # (TQ, HWp) native dtype
    pm = pm_ref[...]        # (P, HWp)  native dtype

    contract_hw = (((1,), (1,)), ((), ()))
    # Spatial pyramid pooling as MXU contractions over H*W, f32 accumulation.
    d_pool = lax.dot_general(d, pm, contract_hw,
                             preferred_element_type=jnp.float32)   # (C, P)
    u_pool = lax.dot_general(u, pm, contract_hw,
                             preferred_element_type=jnp.float32)   # (TQ, P)

    # Scaled dot-product attention over the channel axis (f32).
    scores = lax.dot_general(u_pool, d_pool, (((1,), (1,)), ((), ())),
                             preferred_element_type=jnp.float32) * inv_sqrt_dk  # (TQ, C)

    m = jnp.max(scores, axis=-1, keepdims=True)
    e = jnp.exp(scores - m)
    attn = e * pl.reciprocal(jnp.sum(e, axis=-1, keepdims=True), approx=True)   # (TQ, C)

    # y = attn @ d_flat ; accumulate f32, store in the input dtype.
    y = jnp.dot(attn.astype(d.dtype), d, preferred_element_type=jnp.float32)    # (TQ, HWp)
    o_ref[0] = y.astype(o_ref.dtype)


def _pick_query_tile(C, max_tq=256):
    """Largest divisor of C that is a multiple of 8 and <= max_tq; else no tiling."""
    if C <= max_tq:
        return C
    for tq in (256, 128, 64, 32, 16, 8):
        if C % tq == 0:
            return tq
    return C  # C not divisible by 8: fall back to one full-channel tile


def pool_ca_layer(d, u, levels=(1, 2, 4)):
    assert d.shape == u.shape and d.dtype == u.dtype
    bs, C, H, W = d.shape
    HW = H * W
    HWp = ((HW + 127) // 128) * 128  # lane-dense last dim (multiple of 128)
    dtype = d.dtype

    pm_np = _adaptive_pool_matrix(H, W, levels)
    P = pm_np.shape[0]
    if HWp != HW:
        pm_np = np.pad(pm_np, ((0, 0), (0, HWp - HW)))  # zero columns for padded HW
    pm = jnp.asarray(pm_np, dtype=dtype)

    d_flat = d.reshape(bs, C, HW)
    u_flat = u.reshape(bs, C, HW)
    if HWp != HW:
        pad = ((0, 0), (0, 0), (0, HWp - HW))
        d_flat = jnp.pad(d_flat, pad)
        u_flat = jnp.pad(u_flat, pad)

    TQ = _pick_query_tile(C)
    n_q = C // TQ

    # VMEM budget: double-buffered d / u / out blocks + pooling matrix + f32
    # intermediates, clamped to [32 MiB, 48 MiB] so it is safe on every generation
    # (v7x physical VMEM is 64 MiB per TensorCore; v5e/v6e have 128 MiB).
    itemsize = jnp.dtype(dtype).itemsize
    est = 2 * (C + 2 * TQ) * HWp * itemsize          # double-buffered input/output slabs
    est += 2 * P * HWp * itemsize                    # pooling matrix
    est += 4 * (TQ * C + (C + TQ) * P + TQ * HWp)    # f32 scores / pools / y
    vmem_limit = int(min(max(int(est * 1.5), 32 * 1024 * 1024), 48 * 1024 * 1024))

    kernel = functools.partial(_pool_ca_kernel, inv_sqrt_dk=1.0 / math.sqrt(P))

    out = pl.pallas_call(
        kernel,
        out_shape=jax.ShapeDtypeStruct((bs, C, HWp), dtype),
        grid=(bs, n_q),
        in_specs=[
            pl.BlockSpec((1, C, HWp), lambda b, q: (b, 0, 0)),    # full d slab, resident over q
            pl.BlockSpec((1, TQ, HWp), lambda b, q: (b, q, 0)),   # query-channel tile of u
            pl.BlockSpec((P, HWp), lambda b, q: (0, 0)),          # pooling matrix, resident
        ],
        out_specs=pl.BlockSpec((1, TQ, HWp), lambda b, q: (b, q, 0)),
        compiler_params=pltpu.CompilerParams(
            dimension_semantics=("parallel", "parallel"),
            vmem_limit_bytes=vmem_limit,
        ),
    )(d_flat, u_flat, pm)

    if HWp != HW:
        out = out[:, :, :HW]
    return out.reshape(bs, C, H, W)


def _reference(d, u, levels=(1, 2, 4)):
    """Pure-JAX reference for correctness checking (f32 math)."""
    bs, C, H, W = d.shape
    pm = jnp.asarray(_adaptive_pool_matrix(H, W, levels))  # (P, HW)
    P = pm.shape[0]
    d_flat = d.reshape(bs, C, H * W).astype(jnp.float32)
    u_flat = u.reshape(bs, C, H * W).astype(jnp.float32)
    d_pool = jnp.einsum("bcs,ps->bcp", d_flat, pm)
    u_pool = jnp.einsum("bcs,ps->bcp", u_flat, pm)
    scores = jnp.einsum("bcp,bdp->bcd", u_pool, d_pool) / jnp.sqrt(float(P))
    attn = jax.nn.softmax(scores, axis=-1)
    y = jnp.einsum("bcd,bds->bcs", attn, d_flat)
    return y.reshape(bs, C, H, W).astype(d.dtype)


if __name__ == "__main__":
    key = jax.random.PRNGKey(0)
    k1, k2 = jax.random.split(key)
    bs, C, H, W = 2, 4, 16, 16
    levels = (1, 2, 4)  # P = 1 + 4 + 16 = 21

    d = jax.random.normal(k1, (bs, C, H, W), dtype=jnp.float32)
    u = jax.random.normal(k2, (bs, C, H, W), dtype=jnp.float32)

    y = jax.block_until_ready(pool_ca_layer(d, u, levels))
    y_ref = _reference(d, u, levels)

    # Tolerance relaxed vs. the pure-JAX reference because the softmax denominator uses
    # the EUP approximate reciprocal (pl.reciprocal(..., approx=True)).
    np.testing.assert_allclose(np.asarray(y), np.asarray(y_ref), rtol=1e-2, atol=1e-2)

    print("KERNEL_OK")
</pallas_src>

<mosaic_0001>
module attributes {stable_mosaic.version = 11 : i64} {
  func.func @_pool_ca_kernel(%arg0: i32, %arg1: i32, %arg2: memref<1x4x256xf32, #tpu.memory_space<vmem>>, %arg3: memref<1x4x256xf32, #tpu.memory_space<vmem>>, %arg4: memref<21x256xf32, #tpu.memory_space<vmem>>, %arg5: memref<1x4x256xf32, #tpu.memory_space<vmem>>) attributes {dimension_semantics = [#tpu.dimension_semantics<parallel>, #tpu.dimension_semantics<parallel>], iteration_bounds = array<i64: 2, 1>, scalar_prefetch = 0 : i64, scratch_operands = 0 : i64, tpu.core_type = #tpu.core_type<tc>, window_params = [{transform_indices = @transform_0, window_bounds = array<i64: 1, 4, 256>}, {transform_indices = @transform_1, window_bounds = array<i64: 1, 4, 256>}, {pipeline_mode = #tpu.pipeline_mode<synchronous>, transform_indices = @transform_2, window_bounds = array<i64: 21, 256>}, {transform_indices = @transform_3, window_bounds = array<i64: 1, 4, 256>}]} {
    %c0 = arith.constant 0 : index
    %c0_0 = arith.constant 0 : index
    %c0_1 = arith.constant 0 : index
    %0 = vector.load %arg2[%c0, %c0_0, %c0_1] : memref<1x4x256xf32, #tpu.memory_space<vmem>>, vector<1x4x256xf32>
    %1 = vector.shape_cast %0 : vector<1x4x256xf32> to vector<4x256xf32>
    %c0_2 = arith.constant 0 : index
    %c0_3 = arith.constant 0 : index
    %c0_4 = arith.constant 0 : index
    %2 = vector.load %arg3[%c0_2, %c0_3, %c0_4] : memref<1x4x256xf32, #tpu.memory_space<vmem>>, vector<1x4x256xf32>
    %3 = vector.shape_cast %2 : vector<1x4x256xf32> to vector<4x256xf32>
    %c0_5 = arith.constant 0 : index
    %c0_6 = arith.constant 0 : index
    %4 = vector.load %arg4[%c0_5, %c0_6] : memref<21x256xf32, #tpu.memory_space<vmem>>, vector<21x256xf32>
    %cst = arith.constant dense<0.000000e+00> : vector<4x21xf32>
    %5 = tpu.matmul %1, %4, %cst {dimension_numbers = #tpu.dot_dimension_numbers<[1], [1], [0], [0], [0, 0, 1, 0], [], []>} : vector<4x256xf32>, vector<21x256xf32>, vector<4x21xf32> -> vector<4x21xf32>
    %cst_7 = arith.constant dense<0.000000e+00> : vector<4x21xf32>
    %6 = tpu.matmul %3, %4, %cst_7 {dimension_numbers = #tpu.dot_dimension_numbers<[1], [1], [0], [0], [0, 0, 1, 0], [], []>} : vector<4x256xf32>, vector<21x256xf32>, vector<4x21xf32> -> vector<4x21xf32>
    %cst_8 = arith.constant dense<0.000000e+00> : vector<4x4xf32>
    %7 = tpu.matmul %6, %5, %cst_8 {dimension_numbers = #tpu.dot_dimension_numbers<[1], [1], [0], [0], [0, 0, 1, 0], [], []>} : vector<4x21xf32>, vector<4x21xf32>, vector<4x4xf32> -> vector<4x4xf32>
    %cst_9 = arith.constant 0.218217894 : f32
    %8 = vector.broadcast %cst_9 : f32 to vector<4x4xf32>
    %9 = arith.mulf %7, %8 : vector<4x4xf32>
    %cst_10 = arith.constant dense<0xFF800000> : vector<4xf32>
    %10 = vector.multi_reduction <maximumf>, %9, %cst_10 [1] : vector<4x4xf32> to vector<4xf32>
    %11 = vector.shape_cast %10 : vector<4xf32> to vector<4x1xf32>
    %12 = vector.broadcast %11 : vector<4x1xf32> to vector<4x4xf32>
    %13 = arith.subf %9, %12 : vector<4x4xf32>
    %14 = math.exp %13 : vector<4x4xf32>
    %cst_11 = arith.constant dense<0.000000e+00> : vector<4xf32>
    %15 = vector.multi_reduction <add>, %14, %cst_11 [1] : vector<4x4xf32> to vector<4xf32>
    %16 = vector.shape_cast %15 : vector<4xf32> to vector<4x1xf32>
    %17 = tpu.reciprocal %16 {approx = true} : vector<4x1xf32> -> vector<4x1xf32>
    %18 = vector.broadcast %17 : vector<4x1xf32> to vector<4x4xf32>
    %19 = arith.mulf %14, %18 : vector<4x4xf32>
    %cst_12 = arith.constant dense<0.000000e+00> : vector<4x256xf32>
    %20 = tpu.matmul %19, %1, %cst_12 {dimension_numbers = #tpu.dot_dimension_numbers<[1], [0], [0], [1], [0, 0, 1, 1], [], []>} : vector<4x4xf32>, vector<4x256xf32>, vector<4x256xf32> -> vector<4x256xf32>
    %c0_13 = arith.constant 0 : index
    %c0_14 = arith.constant 0 : index
    %c0_15 = arith.constant 0 : index
    %21 = vector.load %arg5[%c0_13, %c0_14, %c0_15] : memref<1x4x256xf32, #tpu.memory_space<vmem>>, vector<1x4x256xf32>
    %22 = vector.shape_cast %21 : vector<1x4x256xf32> to vector<4x256xf32>
    %23 = vector.shape_cast %20 : vector<4x256xf32> to vector<1x4x256xf32>
    tpu.vector_store %arg5[%c0_13, %c0_14, %c0_15], %23 {strides = array<i32>} : memref<1x4x256xf32, #tpu.memory_space<vmem>>, vector<1x4x256xf32>,
    return
  }
  func.func @transform_0(%arg0: i32, %arg1: i32) -> (i32, i32, i32) {
    %c0_i32 = arith.constant 0 : i32
    %c0_i32_0 = arith.constant 0 : i32
    %c0_i32_1 = arith.constant 0 : i32
    return %arg0, %c0_i32, %c0_i32_0 : i32, i32, i32
  }
  func.func @transform_1(%arg0: i32, %arg1: i32) -> (i32, i32, i32) {
    %c0_i32 = arith.constant 0 : i32
    %c0_i32_0 = arith.constant 0 : i32
    return %arg0, %arg1, %c0_i32 : i32, i32, i32
  }
  func.func @transform_2(%arg0: i32, %arg1: i32) -> (i32, i32) {
    %c0_i32 = arith.constant 0 : i32
    %c0_i32_0 = arith.constant 0 : i32
    %c0_i32_1 = arith.constant 0 : i32
    return %c0_i32, %c0_i32_0 : i32, i32
  }
  func.func @transform_3(%arg0: i32, %arg1: i32) -> (i32, i32, i32) {
    %c0_i32 = arith.constant 0 : i32
    %c0_i32_0 = arith.constant 0 : i32
    return %arg0, %arg1, %c0_i32 : i32, i32, i32
  }
}

</mosaic_0001>

<llo_original>
// kernel: tpu_custom_call.1
$region0: #{tpu_custom_call.1}
  #allocation0 [shape = 'u32[]', space=smem, size = 0x4, offset = 0x4, fixed_abs, tag = 'smem constant byte address 0x4 - core index']
  #allocation1 [shape = 'u32[144,128]{1,0:T(1,128)}', space=vmem, size = 0x12000, scoped, tag = 'internal scratch']
  %s0 = inlined_call_operand.hbm [shape: f32[2,4,256], index: 0, kind: input, shape index: {}]
  %s1 = inlined_call_operand.hbm [shape: f32[2,4,256], index: 1, kind: input, shape index: {}]
  %s2 = inlined_call_operand.hbm [shape: f32[21,256], index: 2, kind: input, shape index: {}]
  %s3 = inlined_call_operand.hbm [shape: f32[2,4,256], index: 3, kind: output, shape index: {}]
  %s4 = sld [smem:[#allocation0]]
  $region57: #{tpu_custom_call.1} parent=0
    _
  %s6 = ssub.s32 1, %s4
  %s7 = scalar_select 0, %s6, %s4
  $region1: #{tpu_custom_call.1} parent=0
    #allocation2 [shape = 'u8[8192]{0}', space=vmem, size = 0x2000, scoped, tag = 'input window, operand 0']
    #allocation3 [shape = 's32[2]{0}', space=sflag, size = 0x8, scoped, tag = 'scoped memory for tpu_custom_call.1']
    #allocation4 [shape = 's32[2]{0}', space=sflag, size = 0x8, scoped, tag = 'scoped memory for tpu_custom_call.1']
    #allocation5 [shape = 'u8[8192]{0}', space=vmem, size = 0x2000, scoped, tag = 'input window, operand 1']
    #allocation6 [shape = 's32[2]{0}', space=sflag, size = 0x8, scoped, tag = 'scoped memory for tpu_custom_call.1']
    #allocation7 [shape = 'u8[24576]{0}', space=vmem, size = 0x6000, scoped, tag = 'input window, operand 2, single buffered']
    #allocation8 [shape = 'u8[8192]{0}', space=vmem, size = 0x2000, scoped, tag = 'output window, operand 0']
    %8 = vsyncpa [#allocation3], 0
    %s9 = scalar_lea.sflag [#allocation3], 1
    %10 = vsyncpa %s9, 0
    %11 = vsyncpa [#allocation6], 0
    %s12 = scalar_lea.sflag [#allocation6], 1
    %13 = vsyncpa %s12, 0
    %14 = vsyncpa [#allocation4], 0
    %s15 = scalar_lea.sflag [#allocation4], 1
    %16 = vsyncpa %s15, 0
    loop: start=0, step=1, limit=4
    $region2: #{tpu_custom_call.1} parent=1 // loop_pre_header
      _
    $region3: #{tpu_custom_call.1} parent=1 // loop_header
      %s18 = sphi 0, %s22
      %p19 = scmp.ge.s32.totalorder %s18, 4
      %s25 = sphi 0, %s37
      %s26 = sphi 0, %s33
      %s27 = sphi 0, %s25
      %s28 = sphi 0, %s26
      %s29 = sphi 0, %s27
      %s30 = sphi 0, %s28
      %s40 = sphi 0, %s42
      %s43 = sphi 0, %s40
      %s44 = sphi 0, %s43
      %s60 = sphi 0, %s44
      %s68 = sphi 0, %s70
      %s71 = sphi 0, %s68
      %s72 = sphi 0, %s71
      %s88 = sphi 0, %s72
      %s92 = sphi 0, %s92
      %s94 = sphi 0, %s92
      %s95 = sphi 0, %s94
      %s109 = sphi 0, %s95
      %s117 = sphi 0, %s119
      %s120 = sphi 0, %s117
      %s121 = sphi 0, %s120
      %s137 = sphi 0, %s121
    $region4: #{tpu_custom_call.1} parent=1 // loop_header_branch
      %21 = sbr.rel (%p19) target = $region8
    $region5: #{tpu_custom_call.1} parent=1 // loop_body
      %s23 = ssub.s32 %s18, 1
      %s24 = ssub.s32 %s18, 2
      %s31 = sadd.s32 1, %s26
      %p32 = scmp.ge.s32.totalorder %s31, 1
      %s33 = scalar_select %p32, 0, %s31
      %s34 = sadd.s32 1, %s25
      %s35 = scalar_select %p32, %s34, %s25
      %p36 = scmp.ge.s32.totalorder %s35, 2
      %s37 = scalar_select %p36, 0, %s35
      %s38 = ssub.s32 %s25, %s37
      %p39 = scmp.eq.s32.totalorder %s38, 0
      %s41 = sadd.s32 %s40, 1
      %s42 = scalar_select %p39, %s40, %s41
      %p45 = pneg %p39
      %p46 = scmp.eq.s32.totalorder %s18, 1
      %p47 = por %p45, %p46
      %p48 = scmp.ne.s32.totalorder %s40, %s43
      %p49 = scmp.eq.s32.totalorder %s18, 0
      %p50 = por %p48, %p49
      %p51 = scmp.ne.s32.totalorder %s40, %s43
      %p52 = scmp.eq.s32.totalorder %s23, 1
      %p53 = por %p51, %p52
      %p54 = scmp.ne.s32.totalorder %s43, %s44
      %p55 = scmp.eq.s32.totalorder %s23, 0
      %p56 = por %p54, %p55
      %p57 = scmp.ne.s32.totalorder %s43, %s44
      %p58 = scmp.eq.s32.totalorder %s24, 1
      %p59 = por %p57, %p58
      %p61 = scmp.ne.s32.totalorder %s44, %s60
      %p62 = scmp.eq.s32.totalorder %s24, 0
      %p63 = por %p61, %p62
      %s64 = ssub.s32 %s25, %s37
      %s65 = ssub.s32 %s26, %s33
      %s66 = sor.u32 %s64, %s65
      %p67 = scmp.eq.s32.totalorder %s66, 0
      %s69 = sadd.s32 %s68, 1
      %s70 = scalar_select %p67, %s68, %s69
      %p73 = pneg %p67
      %p74 = scmp.eq.s32.totalorder %s18, 1
      %p75 = por %p73, %p74
      %p76 = scmp.ne.s32.totalorder %s68, %s71
      %p77 = scmp.eq.s32.totalorder %s18, 0
      %p78 = por %p76, %p77
      %p79 = scmp.ne.s32.totalorder %s68, %s71
      %p80 = scmp.eq.s32.totalorder %s23, 1
      %p81 = por %p79, %p80
      %p82 = scmp.ne.s32.totalorder %s71, %s72
      %p83 = scmp.eq.s32.totalorder %s23, 0
      %p84 = por %p82, %p83
      %p85 = scmp.ne.s32.totalorder %s71, %s72
      %p86 = scmp.eq.s32.totalorder %s24, 1
      %p87 = por %p85, %p86
      %p89 = scmp.ne.s32.totalorder %s72, %s88
      %p90 = scmp.eq.s32.totalorder %s24, 0
      %p91 = por %p89, %p90
      %s93 = sadd.s32 %s92, 1
      %p96 = scmp.eq.s32.totalorder %s18, 1
      %p97 = scmp.ne.s32.totalorder %s92, %s94
      %p98 = scmp.eq.s32.totalorder %s18, 0
      %p99 = por %p97, %p98
      %p100 = scmp.ne.s32.totalorder %s92, %s94
      %p101 = scmp.eq.s32.totalorder %s23, 1
      %p102 = por %p100, %p101
      %p103 = scmp.ne.s32.totalorder %s94, %s95
      %p104 = scmp.eq.s32.totalorder %s23, 0
      %p105 = por %p103, %p104
      %p106 = scmp.ne.s32.totalorder %s94, %s95
      %p107 = scmp.eq.s32.totalorder %s24, 1
      %p108 = por %p106, %p107
      %p110 = scmp.ne.s32.totalorder %s95, %s109
      %p111 = scmp.eq.s32.totalorder %s24, 0
      %p112 = por %p110, %p111
      %s113 = ssub.s32 %s25, %s37
      %s114 = ssub.s32 %s26, %s33
      %s115 = sor.u32 %s113, %s114
      %p116 = scmp.eq.s32.totalorder %s115, 0
      %s118 = sadd.s32 %s117, 1
      %s119 = scalar_select %p116, %s117, %s118
      %p122 = pneg %p116
      %p123 = scmp.eq.s32.totalorder %s18, 1
      %p124 = por %p122, %p123
      %p125 = scmp.ne.s32.totalorder %s117, %s120
      %p126 = scmp.eq.s32.totalorder %s18, 0
      %p127 = por %p125, %p126
      %p128 = scmp.ne.s32.totalorder %s117, %s120
      %p129 = scmp.eq.s32.totalorder %s23, 1
      %p130 = por %p128, %p129
      %p131 = scmp.ne.s32.totalorder %s120, %s121
      %p132 = scmp.eq.s32.totalorder %s23, 0
      %p133 = por %p131, %p132
      %p134 = scmp.ne.s32.totalorder %s120, %s121
      %p135 = scmp.eq.s32.totalorder %s24, 1
      %p136 = por %p134, %p135
      %p138 = scmp.ne.s32.totalorder %s121, %s137
      %p139 = scmp.eq.s32.totalorder %s24, 0
      %p140 = por %p138, %p139
      %p141 = scmp.le.s32.totalorder 1, %s18
      %p142 = scmp.lt.s32.totalorder %s18, 3
      %p143 = pnand %p141, %p142
      %p144 = pneg %p143
      // Predicated region
      $region9: #{tpu_custom_call.1} parent=5 // pred_check
        _
      $region10: #{tpu_custom_call.1} parent=5 // pred_check_branch
        %146 = sbr.rel (%p143) target = $region12
      $region11: #{tpu_custom_call.1} parent=5 // pred_region
        %s147 = ssub.s32 %s18, 1
        // Predicated region
        $region13: #{tpu_custom_call.1} parent=11 // pred_check
          %p148 = pneg %p105
        $region14: #{tpu_custom_call.1} parent=11 // pred_check_branch
          %150 = sbr.rel (%p148) target = $region16
        $region15: #{tpu_custom_call.1} parent=11 // pred_region
          %s152 = ssub.s32 768, 768
          %153 = vsyncadd [#allocation6], %s152
          %s154 = sshll.u32 [#allocation7], 4
          %s155 = int_to_ptr.vmem [resolvable:$true] %s154
          %160 = dma.hbm_to_vmem [thread:$0]  %s2, 768, %s155, [#allocation6], 256, 256, 16
        $region16: #{tpu_custom_call.1} parent=11 // pred_fallthru
          _
      $region12: #{tpu_custom_call.1} parent=5 // pred_fallthru
        _
      %p161 = scmp.lt.s32.totalorder %s18, 2
      // Predicated region
      $region17: #{tpu_custom_call.1} parent=5 // pred_check
        %p162 = pneg %p161
      $region18: #{tpu_custom_call.1} parent=5 // pred_check_branch
        %164 = sbr.rel (%p162) target = $region20
      $region19: #{tpu_custom_call.1} parent=5 // pred_region
        // Predicated region
        $region21: #{tpu_custom_call.1} parent=19 // pred_check
          %p165 = pneg %p50
        $region22: #{tpu_custom_call.1} parent=19 // pred_check_branch
          %167 = sbr.rel (%p165) target = $region24
        $region23: #{tpu_custom_call.1} parent=19 // pred_region
          %s168 = sand.u32 %s40, 1
          %s169 = scalar_lea.sflag [#allocation3], %s168
          %s170 = sand.u32 %s40, 1
          %s171 = smul.addr %s170, 8
          %s172 = scalar_lea.vmem [#allocation2], %s171
          %s174 = ssub.s32 128, 128
          %175 = vsyncadd %s169, %s174
          %s176 = smul.addr %s25, 2
          %s177 = smul.addr %s176, 64
          %s178 = scalar_lea.hbm %s0, %s177
          %s180 = sshll.u32 %s172, 4
          %s181 = int_to_ptr.vmem [resolvable:$true] %s180
          %183 = dma.hbm_to_vmem [thread:$0]  %s178, 128, %s181, %s169
        $region24: #{tpu_custom_call.1} parent=19 // pred_fallthru
          _
        // Predicated region
        $region25: #{tpu_custom_call.1} parent=19 // pred_check
          %p184 = pneg %p78
        $region26: #{tpu_custom_call.1} parent=19 // pred_check_branch
          %186 = sbr.rel (%p184) target = $region28
        $region27: #{tpu_custom_call.1} parent=19 // pred_region
          %s187 = sand.u32 %s18, 1
          %s188 = scalar_lea.sflag [#allocation6], %s187
          %s189 = sand.u32 %s68, 1
          %s190 = smul.addr %s189, 8
          %s191 = scalar_lea.vmem [#allocation5], %s190
          %s193 = ssub.s32 128, 128
          %194 = vsyncadd %s188, %s193
          %s195 = smul.addr %s26, 2
          %s196 = smul.addr %s25, 2
          %s197 = sadd.s32 %s195, %s196
          %s198 = smul.addr %s197, 64
          %s199 = scalar_lea.hbm %s1, %s198
          %s201 = sshll.u32 %s191, 4
          %s202 = int_to_ptr.vmem [resolvable:$true] %s201
          %204 = dma.hbm_to_vmem [thread:$0]  %s199, 128, %s202, %s188
        $region28: #{tpu_custom_call.1} parent=19 // pred_fallthru
          _
      $region20: #{tpu_custom_call.1} parent=5 // pred_fallthru
        _
      %p205 = scmp.le.s32.totalorder 1, %s18
      %p206 = scmp.lt.s32.totalorder %s18, 3
      %p207 = pnand %p205, %p206
      %p208 = pneg %p207
      // Predicated region
      $region29: #{tpu_custom_call.1} parent=5 // pred_check
        _
      $region30: #{tpu_custom_call.1} parent=5 // pred_check_branch
        %210 = sbr.rel (%p207) target = $region32
      $region31: #{tpu_custom_call.1} parent=5 // pred_region
        %s211 = ssub.s32 %s18, 1
        %s212 = sand.u32 %s43, 1
        %s213 = scalar_lea.sflag [#allocation3], %s212
        %s214 = sand.u32 %s43, 1
        %s215 = smul.addr %s214, 8
        %s216 = scalar_lea.vmem [#allocation2], %s215
        // Predicated region
        $region33: #{tpu_custom_call.1} parent=31 // pred_check
          %p217 = pneg %p56
        $region34: #{tpu_custom_call.1} parent=31 // pred_check_branch
          %219 = sbr.rel (%p217) target = $region36
        $region35: #{tpu_custom_call.1} parent=31 // pred_region
          %220 = dma.done %s213, 128
        $region36: #{tpu_custom_call.1} parent=31 // pred_fallthru
          _
        %s221 = sand.u32 %s23, 1
        %s222 = scalar_lea.sflag [#allocation6], %s221
        %s223 = sand.u32 %s71, 1
        %s224 = smul.addr %s223, 8
        %s225 = scalar_lea.vmem [#allocation5], %s224
        // Predicated region
        $region37: #{tpu_custom_call.1} parent=31 // pred_check
          %p226 = pneg %p84
        $region38: #{tpu_custom_call.1} parent=31 // pred_check_branch
          %228 = sbr.rel (%p226) target = $region40
        $region39: #{tpu_custom_call.1} parent=31 // pred_region
          %229 = dma.done %s222, 128
        $region40: #{tpu_custom_call.1} parent=31 // pred_fallthru
          _
        // Predicated region
        $region41: #{tpu_custom_call.1} parent=31 // pred_check
          %p230 = pneg %p105
        $region42: #{tpu_custom_call.1} parent=31 // pred_check_branch
          %232 = sbr.rel (%p230) target = $region44
        $region43: #{tpu_custom_call.1} parent=31 // pred_region
          %233 = dma.done [#allocation6], 768
        $region44: #{tpu_custom_call.1} parent=31 // pred_fallthru
          _
        %s234 = sand.u32 %s43, 1
        %s235 = scalar_lea.sflag [#allocation3], %s234
        %s236 = sand.u32 %s43, 1
        %s237 = smul.addr %s236, 8
        %s238 = scalar_lea.vmem [#allocation2], %s237
        %p239 = pneg %p56
        %p240 = pneg %p53
        %s241 = sand.u32 %s23, 1
        %s242 = scalar_lea.sflag [#allocation6], %s241
        %s243 = sand.u32 %s71, 1
        %s244 = smul.addr %s243, 8
        %s245 = scalar_lea.vmem [#allocation5], %s244
        %p246 = pneg %p84
        %p247 = pneg %p81
        %p248 = pneg %p105
        %p249 = pneg %p102
        %p250 = pneg %p133
        %p251 = pneg %p130
        %s252 = sand.u32 %s120, 1
        %s253 = scalar_lea.sflag [#allocation4], %s252
        %s254 = sand.u32 %s120, 1
        %s255 = smul.addr %s254, 8
        %s256 = scalar_lea.vmem [#allocation8], %s255
        %v257 = vld [vmem:[%s216] sm:$0xff]
        %v258 = vld [vmem:[%s225] sm:$0xff]
        %v259 = vld [vmem:[#allocation7] sm:$0xff]
        %v260 = vld [vmem:[#allocation7 + $0x8] sm:$0xff]
        %v261 = vld [vmem:[#allocation7 + $0x10] sm:$0xff]
        %v262 = vld [vmem:[#allocation7 + $0x18] sm:$0xff]
        %v263 = vld [vmem:[#allocation7 + $0x20] sm:$0x1f]
        %v264 = vld [vmem:[#allocation7 + $0x28] sm:$0x1f]
        %v266 = vcombine.high %v257, %v257
        %268 = vmatprep.subr.mxu0 %v260
        %269 = vmatpush1.xpose.msra.mxu0 %v259
        %270 = vmatprep.subr.mxu0 %v262
        %271 = vmatpush1.xpose.msra.mxu0 %v261
        %272 = vmatprep.subr.mxu0 %v264
        %273 = vmatpush1.xpose.msra.mxu0 %v263
        %274 = vmatprep.subr.mxu0 0.0
        %275 = vmatpush1.xpose.msra.mxu0 0.0
        %276 = vmatprep.subr.mxu0 0.0
        %277 = vmatpush1.xpose.msra.mxu0 0.0
        %278 = vmatprep.subr.mxu0 0.0
        %279 = vmatpush1.xpose.msra.mxu0 0.0
        %280 = vmatprep.subr.mxu0 0.0
        %281 = vmatpush1.xpose.msra.mxu0 0.0
        %282 = vmatprep.subr.mxu0 0.0
        %283 = vmatpush1.xpose.msra.mxu0 0.0
        %284 = vmatprep.subr.mxu0 0.0
        %285 = vmatpush1.xpose.msra.mxu0 0.0
        %286 = vmatprep.subr.mxu0 0.0
        %287 = vmatpush1.xpose.msra.mxu0 0.0
        %288 = vmatprep.subr.mxu0 0.0
        %289 = vmatpush1.xpose.msra.mxu0 0.0
        %290 = vmatprep.subr.mxu0 0.0
        %291 = vmatpush1.xpose.msra.mxu0 0.0
        %292 = vmatprep.subr.mxu0 0.0
        %293 = vmatpush1.xpose.msra.mxu0 0.0
        %294 = vmatprep.subr.mxu0 0.0
        %295 = vmatpush1.xpose.msra.mxu0 0.0
        %296 = vmatprep.subr.mxu0 0.0
        %297 = vmatpush1.xpose.msra.mxu0 0.0
        %298 = vmatprep.subr.mxu0 0.0
        %299 = vmatpush1.xpose.msra.mxu0 0.0
        %300 = vmatprep.subr.mxu0 0.0
        %301 = vmatpush1.xpose.msra.mxu0 0.0
        %302 = vmatprep.subr.mxu0 0.0
        %303 = vmatpush1.xpose.msra.mxu0 0.0
        %304 = vmatprep.subr.mxu0 0.0
        %305 = vmatpush1.xpose.msra.mxu0 0.0
        %306 = vmatprep.subr.mxu0 0.0
        %307 = vmatpush1.xpose.msra.mxu0 0.0
        %308 = vmatprep.subr.mxu0 0.0
        %309 = vmatpush1.xpose.msra.mxu0 0.0
        %310 = vmatprep.subr.mxu0 0.0
        %311 = vmatpush1.xpose.msra.mxu0 0.0
        %312 = vmatprep.subr.mxu0 0.0
        %313 = vmatpush1.xpose.msra.mxu0 0.0
        %314 = vmatprep.subr.mxu0 0.0
        %315 = vmatpush1.xpose.msra.mxu0 0.0
        %316 = vmatprep.subr.mxu0 0.0
        %317 = vmatpush1.xpose.msra.mxu0 0.0
        %318 = vmatprep.subr.mxu0 0.0
        %319 = vmatpush1.xpose.msra.mxu0 0.0
        %320 = vmatprep.subr.mxu0 0.0
        %321 = vmatpush1.xpose.msra.mxu0 0.0
        %322 = vmatprep.subr.mxu0 0.0
        %323 = vmatpush1.xpose.msra.mxu0 0.0
        %324 = vmatprep.subr.mxu0 0.0
        %325 = vmatpush1.xpose.msra.mxu0 0.0
        %326 = vmatprep.subr.mxu0 0.0
        %327 = vmatpush1.xpose.msra.mxu0 0.0
        %328 = vmatprep.subr.mxu0 0.0
        %329 = vmatpush1.xpose.msra.mxu0 0.0
        %330 = vmatprep.subr.mxu0 0.0
        %331 = vmatpush1.xpose.msra.mxu0 0.0
        %332 = vmatprep.mubr.f32.mxu0 %v266
        %333 = vmatmul.mubr.f32.gmra.mrb[0].mxu0 %v257
        %v334 = vpop.f32.mrb[0].mxu0
        %v335 = vadd.f32 0.0, %v334
        %v336 = vpop.f32.mrb[0].mxu0
        %337 = vdwg.mxu0
        %v339 = vcombine.high %v258, %v258
        %341 = vmatprep.subr.mxu0 %v260
        %342 = vmatpush1.xpose.msra.mxu0 %v259
        %343 = vmatprep.subr.mxu0 %v262
        %344 = vmatpush1.xpose.msra.mxu0 %v261
        %345 = vmatprep.subr.mxu0 %v264
        %346 = vmatpush1.xpose.msra.mxu0 %v263
        %347 = vmatprep.subr.mxu0 0.0
        %348 = vmatpush1.xpose.msra.mxu0 0.0
        %349 = vmatprep.subr.mxu0 0.0
        %350 = vmatpush1.xpose.msra.mxu0 0.0
        %351 = vmatprep.subr.mxu0 0.0
        %352 = vmatpush1.xpose.msra.mxu0 0.0
        %353 = vmatprep.subr.mxu0 0.0
        %354 = vmatpush1.xpose.msra.mxu0 0.0
        %355 = vmatprep.subr.mxu0 0.0
        %356 = vmatpush1.xpose.msra.mxu0 0.0
        %357 = vmatprep.subr.mxu0 0.0
        %358 = vmatpush1.xpose.msra.mxu0 0.0
        %359 = vmatprep.subr.mxu0 0.0
        %360 = vmatpush1.xpose.msra.mxu0 0.0
        %361 = vmatprep.subr.mxu0 0.0
        %362 = vmatpush1.xpose.msra.mxu0 0.0
        %363 = vmatprep.subr.mxu0 0.0
        %364 = vmatpush1.xpose.msra.mxu0 0.0
        %365 = vmatprep.subr.mxu0 0.0
        %366 = vmatpush1.xpose.msra.mxu0 0.0
        %367 = vmatprep.subr.mxu0 0.0
        %368 = vmatpush1.xpose.msra.mxu0 0.0
        %369 = vmatprep.subr.mxu0 0.0
        %370 = vmatpush1.xpose.msra.mxu0 0.0
        %371 = vmatprep.subr.mxu0 0.0
        %372 = vmatpush1.xpose.msra.mxu0 0.0
        %373 = vmatprep.subr.mxu0 0.0
        %374 = vmatpush1.xpose.msra.mxu0 0.0
        %375 = vmatprep.subr.mxu0 0.0
        %376 = vmatpush1.xpose.msra.mxu0 0.0
        %377 = vmatprep.subr.mxu0 0.0
        %378 = vmatpush1.xpose.msra.mxu0 0.0
        %379 = vmatprep.subr.mxu0 0.0
        %380 = vmatpush1.xpose.msra.mxu0 0.0
        %381 = vmatprep.subr.mxu0 0.0
        %382 = vmatpush1.xpose.msra.mxu0 0.0
        %383 = vmatprep.subr.mxu0 0.0
        %384 = vmatpush1.xpose.msra.mxu0 0.0
        %385 = vmatprep.subr.mxu0 0.0
        %386 = vmatpush1.xpose.msra.mxu0 0.0
        %387 = vmatprep.subr.mxu0 0.0
        %388 = vmatpush1.xpose.msra.mxu0 0.0
        %389 = vmatprep.subr.mxu0 0.0
        %390 = vmatpush1.xpose.msra.mxu0 0.0
        %391 = vmatprep.subr.mxu0 0.0
        %392 = vmatpush1.xpose.msra.mxu0 0.0
        %393 = vmatprep.subr.mxu0 0.0
        %394 = vmatpush1.xpose.msra.mxu0 0.0
        %395 = vmatprep.subr.mxu0 0.0
        %396 = vmatpush1.xpose.msra.mxu0 0.0
        %397 = vmatprep.subr.mxu0 0.0
        %398 = vmatpush1.xpose.msra.mxu0 0.0
        %399 = vmatprep.subr.mxu0 0.0
        %400 = vmatpush1.xpose.msra.mxu0 0.0
        %401 = vmatprep.subr.mxu0 0.0
        %402 = vmatpush1.xpose.msra.mxu0 0.0
        %403 = vmatprep.subr.mxu0 0.0
        %404 = vmatpush1.xpose.msra.mxu0 0.0
        %405 = vmatprep.mubr.f32.mxu0 %v339
        %406 = vmatmul.mubr.f32.gmra.mrb[0].mxu0 %v258
        %v407 = vpop.f32.mrb[0].mxu0
        %v408 = vadd.f32 0.0, %v407
        %v409 = vpop.f32.mrb[0].mxu0
        %410 = vdwg.mxu0
        %vm411 = vcmask 171008
        %v413 = vsel %vm411, %v408, 0
        %v416 = vsel %vm411, %v335, 0
        %418 = vmatprep.subr.mxu0 0.0
        %419 = vmatpush1.xpose.msra.mxu0 %v416
        %420 = vmatprep.subr.mxu0 0.0
        %421 = vmatpush1.xpose.msra.mxu0 0.0
        %422 = vmatprep.subr.mxu0 0.0
        %423 = vmatpush1.xpose.msra.mxu0 0.0
        %424 = vmatprep.subr.mxu0 0.0
        %425 = vmatpush1.xpose.msra.mxu0 0.0
        %426 = vmatprep.subr.mxu0 0.0
        %427 = vmatpush1.xpose.msra.mxu0 0.0
        %428 = vmatprep.subr.mxu0 0.0
        %429 = vmatpush1.xpose.msra.mxu0 0.0
        %430 = vmatprep.subr.mxu0 0.0
        %431 = vmatpush1.xpose.msra.mxu0 0.0
        %432 = vmatprep.subr.mxu0 0.0
        %433 = vmatpush1.xpose.msra.mxu0 0.0
        %434 = vmatprep.subr.mxu0 0.0
        %435 = vmatpush1.xpose.msra.mxu0 0.0
        %436 = vmatprep.subr.mxu0 0.0
        %437 = vmatpush1.xpose.msra.mxu0 0.0
        %438 = vmatprep.subr.mxu0 0.0
        %439 = vmatpush1.xpose.msra.mxu0 0.0
        %440 = vmatprep.subr.mxu0 0.0
        %441 = vmatpush1.xpose.msra.mxu0 0.0
        %442 = vmatprep.subr.mxu0 0.0
        %443 = vmatpush1.xpose.msra.mxu0 0.0
        %444 = vmatprep.subr.mxu0 0.0
        %445 = vmatpush1.xpose.msra.mxu0 0.0
        %446 = vmatprep.subr.mxu0 0.0
        %447 = vmatpush1.xpose.msra.mxu0 0.0
        %448 = vmatprep.subr.mxu0 0.0
        %449 = vmatpush1.xpose.msra.mxu0 0.0
        %450 = vmatprep.subr.mxu0 0.0
        %451 = vmatpush1.xpose.msra.mxu0 0.0
        %452 = vmatprep.subr.mxu0 0.0
        %453 = vmatpush1.xpose.msra.mxu0 0.0
        %454 = vmatprep.subr.mxu0 0.0
        %455 = vmatpush1.xpose.msra.mxu0 0.0
        %456 = vmatprep.subr.mxu0 0.0
        %457 = vmatpush1.xpose.msra.mxu0 0.0
        %458 = vmatprep.subr.mxu0 0.0
        %459 = vmatpush1.xpose.msra.mxu0 0.0
        %460 = vmatprep.subr.mxu0 0.0
        %461 = vmatpush1.xpose.msra.mxu0 0.0
        %462 = vmatprep.subr.mxu0 0.0
        %463 = vmatpush1.xpose.msra.mxu0 0.0
        %464 = vmatprep.subr.mxu0 0.0
        %465 = vmatpush1.xpose.msra.mxu0 0.0
        %466 = vmatprep.subr.mxu0 0.0
        %467 = vmatpush1.xpose.msra.mxu0 0.0
        %468 = vmatprep.subr.mxu0 0.0
        %469 = vmatpush1.xpose.msra.mxu0 0.0
        %470 = vmatprep.subr.mxu0 0.0
        %471 = vmatpush1.xpose.msra.mxu0 0.0
        %472 = vmatprep.subr.mxu0 0.0
        %473 = vmatpush1.xpose.msra.mxu0 0.0
        %474 = vmatprep.subr.mxu0 0.0
        %475 = vmatpush1.xpose.msra.mxu0 0.0
        %476 = vmatprep.subr.mxu0 0.0
        %477 = vmatpush1.xpose.msra.mxu0 0.0
        %478 = vmatprep.subr.mxu0 0.0
        %479 = vmatpush1.xpose.msra.mxu0 0.0
        %480 = vmatprep.subr.mxu0 0.0
        %481 = vmatpush1.xpose.msra.mxu0 0.0
        %482 = vmatprep.mubr.f32.mxu0 0.0
        %483 = vmatmul.mubr.f32.gmra.mrb[0].mxu0 %v413
        %v484 = vpop.f32.mrb[0].mxu0
        %v485 = vadd.f32 0.0, %v484
        %v486 = vpop.f32.mrb[0].mxu0
        %487 = vdwg.mxu0
        %v488 = vmul.f32 %v485, 0.2182179
        %vm489 = vcmask 27648
        %v490 = vsel %vm489, %v488, -inf
        %491 = vmax.xlane.f32.xlu0 %v490
        %v492 = vpop.xlane.xlu0 %491
        %v493 = vsub.f32 %v488, %v492
        %v494 = vmul.f32 %v493, 1.442695
        %v495 = vpow.pop %v494
        %v496 = vsel %vm489, %v495, 0.0
        %497 = vadd.xlane.f32.xlu0 %v496
        %v498 = vpop.xlane.xlu0 %497
        %v499 = vrcp.pop %v498
        %v500 = vmul.f32 %v495, %v499
        %vm501 = vcmask 31744
        %v503 = vsel %vm501, %v500, 0
        %vm505 = vcmask 1043456
        %v506 = vsel %vm505, %v257, 0
        %v508 = vsel %vm505, %v266, 0
        %510 = vmatprep.subr.mxu0 %v508
        %511 = vmatpush1.msra.mxu0 %v506
        %512 = vmatprep.subr.mxu0 0.0
        %513 = vmatpush1.msra.mxu0 0.0
        %514 = vmatprep.subr.mxu0 0.0
        %515 = vmatpush1.msra.mxu0 0.0
        %516 = vmatprep.subr.mxu0 0.0
        %517 = vmatpush1.msra.mxu0 0.0
        %518 = vmatprep.subr.mxu0 0.0
        %519 = vmatpush1.msra.mxu0 0.0
        %520 = vmatprep.subr.mxu0 0.0
        %521 = vmatpush1.msra.mxu0 0.0
        %522 = vmatprep.subr.mxu0 0.0
        %523 = vmatpush1.msra.mxu0 0.0
        %524 = vmatprep.subr.mxu0 0.0
        %525 = vmatpush1.msra.mxu0 0.0
        %526 = vmatprep.subr.mxu0 0.0
        %527 = vmatpush1.msra.mxu0 0.0
        %528 = vmatprep.subr.mxu0 0.0
        %529 = vmatpush1.msra.mxu0 0.0
        %530 = vmatprep.subr.mxu0 0.0
        %531 = vmatpush1.msra.mxu0 0.0
        %532 = vmatprep.subr.mxu0 0.0
        %533 = vmatpush1.msra.mxu0 0.0
        %534 = vmatprep.subr.mxu0 0.0
        %535 = vmatpush1.msra.mxu0 0.0
        %536 = vmatprep.subr.mxu0 0.0
        %537 = vmatpush1.msra.mxu0 0.0
        %538 = vmatprep.subr.mxu0 0.0
        %539 = vmatpush1.msra.mxu0 0.0
        %540 = vmatprep.subr.mxu0 0.0
        %541 = vmatpush1.msra.mxu0 0.0
        %542 = vmatprep.subr.mxu0 0.0
        %543 = vmatpush1.msra.mxu0 0.0
        %544 = vmatprep.subr.mxu0 0.0
        %545 = vmatpush1.msra.mxu0 0.0
        %546 = vmatprep.subr.mxu0 0.0
        %547 = vmatpush1.msra.mxu0 0.0
        %548 = vmatprep.subr.mxu0 0.0
        %549 = vmatpush1.msra.mxu0 0.0
        %550 = vmatprep.subr.mxu0 0.0
        %551 = vmatpush1.msra.mxu0 0.0
        %552 = vmatprep.subr.mxu0 0.0
        %553 = vmatpush1.msra.mxu0 0.0
        %554 = vmatprep.subr.mxu0 0.0
        %555 = vmatpush1.msra.mxu0 0.0
        %556 = vmatprep.subr.mxu0 0.0
        %557 = vmatpush1.msra.mxu0 0.0
        %558 = vmatprep.subr.mxu0 0.0
        %559 = vmatpush1.msra.mxu0 0.0
        %560 = vmatprep.subr.mxu0 0.0
        %561 = vmatpush1.msra.mxu0 0.0
        %562 = vmatprep.subr.mxu0 0.0
        %563 = vmatpush1.msra.mxu0 0.0
        %564 = vmatprep.subr.mxu0 0.0
        %565 = vmatpush1.msra.mxu0 0.0
        %566 = vmatprep.subr.mxu0 0.0
        %567 = vmatpush1.msra.mxu0 0.0
        %568 = vmatprep.subr.mxu0 0.0
        %569 = vmatpush1.msra.mxu0 0.0
        %570 = vmatprep.subr.mxu0 0.0
        %571 = vmatpush1.msra.mxu0 0.0
        %572 = vmatprep.subr.mxu0 0.0
        %573 = vmatpush1.msra.mxu0 0.0
        %574 = vmatprep.mubr.f32.mxu0 0.0
        %575 = vmatmul.mubr.f32.gmra.mrb[0].mxu0 %v503
        %v576 = vpop.f32.mrb[0].mxu0
        %v577 = vadd.f32 0.0, %v576
        %v578 = vpop.f32.mrb[0].mxu0
        %v579 = vadd.f32 0.0, %v578
        %580 = vdwg.mxu0
        %v583 = vcombine.low %v577, %v579
        %585 = vst [vmem:[%s256] sm:$0xff] %v583
        %s586 = sand.u32 %s120, 1
        %s587 = scalar_lea.sflag [#allocation4], %s586
        %s588 = sand.u32 %s120, 1
        %s589 = smul.addr %s588, 8
        %s590 = scalar_lea.vmem [#allocation8], %s589
        // Predicated region
        $region45: #{tpu_custom_call.1} parent=31 // pred_check
          %p591 = pneg %p130
        $region46: #{tpu_custom_call.1} parent=31 // pred_check_branch
          %593 = sbr.rel (%p591) target = $region48
        $region47: #{tpu_custom_call.1} parent=31 // pred_region
          %s595 = ssub.s32 128, 128
          %596 = vsyncadd %s587, %s595
          %s597 = smul.addr %s28, 2
          %s598 = smul.addr %s27, 2
          %s599 = sadd.s32 %s597, %s598
          %s600 = smul.addr %s599, 64
          %s601 = scalar_lea.hbm %s3, %s600
          %s603 = sshll.u32 %s590, 4
          %s604 = int_to_ptr.vmem [resolvable:$true] %s603
          %606 = dma.vmem_to_hbm [thread:$0]  %s604, 128, %s601, %s587
        $region48: #{tpu_custom_call.1} parent=31 // pred_fallthru
          _
      $region32: #{tpu_custom_call.1} parent=5 // pred_fallthru
        _
      %p607 = scmp.le.s32.totalorder 2, %s18
      // Predicated region
      $region49: #{tpu_custom_call.1} parent=5 // pred_check
        %p608 = pneg %p607
      $region50: #{tpu_custom_call.1} parent=5 // pred_check_branch
        %610 = sbr.rel (%p608) target = $region52
      $region51: #{tpu_custom_call.1} parent=5 // pred_region
        %s611 = ssub.s32 %s18, 2
        // Predicated region
        $region53: #{tpu_custom_call.1} parent=51 // pred_check
          %p612 = pneg %p136
        $region54: #{tpu_custom_call.1} parent=51 // pred_check_branch
          %614 = sbr.rel (%p612) target = $region56
        $region55: #{tpu_custom_call.1} parent=51 // pred_region
          %s615 = sand.u32 %s121, 1
          %s616 = scalar_lea.sflag [#allocation4], %s615
          %s617 = sand.u32 %s121, 1
          %s618 = smul.addr %s617, 8
          %s619 = scalar_lea.vmem [#allocation8], %s618
          %620 = dma.done %s616, 128
        $region56: #{tpu_custom_call.1} parent=51 // pred_fallthru
          _
      $region52: #{tpu_custom_call.1} parent=5 // pred_fallthru
        _
    $region6: #{tpu_custom_call.1} parent=1 // loop_footer
      %s22 = sadd.s32 1, %s18
    $region7: #{tpu_custom_call.1} parent=1 // loop_footer_branch
      %17 = sbr.rel target = $region3
    $region8: #{tpu_custom_call.1} parent=1 // loop_exit
      _
    %621 = vsyncpa [#allocation3], 1
    %s622 = scalar_lea.sflag [#allocation3], 1
    %623 = vsyncpa %s622, 1
    %624 = vsyncpa [#allocation6], 1
    %s625 = scalar_lea.sflag [#allocation6], 1
    %626 = vsyncpa %s625, 1
    %627 = vsyncpa [#allocation4], 1
    %s628 = scalar_lea.sflag [#allocation4], 1
    %629 = vsyncpa %s628, 1

</llo_original>
